<compile_context>
chip_gen: v6e
topology: v6e:2x2x1
jax: 0.10.0
libtpu: 0.0.40
codegen_flags: <defaults>
</compile_context>

<pallas_src>
import jax
import jax.numpy as jnp
from jax.experimental import pallas as pl
from jax.experimental.pallas import tpu as pltpu

_LANES = 128
_SUBLANES = 8
_TILE = _SUBLANES * _LANES            # minimal alignment unit (1024 elements)
_MAX_BLOCK_ROWS = 2048                # (2048, 128) f32 block = 1 MiB per buffer
_VMEM_LIMIT_BYTES = 32 * 1024 * 1024  # explicit; safe on v5e/v6e (128 MiB) and v7x (64 MiB)


def _bce_with_logits(x, t):
    # Numerically stable BCE-with-logits (matches PyTorch):
    #   max(x, 0) - x*t + log1p(exp(-|x|))
    return jnp.maximum(x, 0.0) - x * t + jnp.log1p(jnp.exp(-jnp.abs(x)))


def _make_sums_kernel(total_rows):
    """Per-block partial sums; writes one (1, 24, 128) output block per grid step.

    Rows  0:8  -> partial sum(t)
    Rows  8:16 -> partial sum(t * bce)
    Rows 16:24 -> partial sum((1 - 2t) * bce)
    """

    def kernel(x_ref, t_ref, o_ref):
        block_rows = x_ref.shape[0]
        x = x_ref[...].astype(jnp.float32)
        t = t_ref[...].astype(jnp.float32)

        if total_rows % block_rows != 0:
            # Ragged last grid block: rows past `total_rows` hold undefined data.
            # Force them to (logit=-1e9, target=0) => bce == 0 exactly.
            rid = (pl.program_id(0) * block_rows
                   + jax.lax.broadcasted_iota(jnp.int32, (block_rows, 1), 0))
            valid = rid < total_rows
            x = jnp.where(valid, x, jnp.float32(-1e9))
            t = jnp.where(valid, t, jnp.float32(0.0))

        bce = _bce_with_logits(x, t)
        r8 = block_rows // _SUBLANES          # block_rows is always a multiple of 8
        shape3 = (r8, _SUBLANES, _LANES)
        # Leading-axis reductions are pure vreg adds on the VPU (no XLU work).
        o_ref[0, 0:8, :] = jnp.sum(t.reshape(shape3), axis=0)
        o_ref[0, 8:16, :] = jnp.sum((t * bce).reshape(shape3), axis=0)
        o_ref[0, 16:24, :] = jnp.sum(((1.0 - 2.0 * t) * bce).reshape(shape3), axis=0)

    return kernel


def _elementwise_kernel(m_ref, x_ref, t_ref, o_ref):
    """Per-element weighted BCE for reduction='none'. m_ref: (1,) f32 in SMEM."""
    m = m_ref[0]
    x = x_ref[...].astype(jnp.float32)
    t = t_ref[...].astype(jnp.float32)
    bce = _bce_with_logits(x, t)
    w = t * (1.0 - m) + (1.0 - t) * m
    o_ref[...] = (w * bce).astype(o_ref.dtype)


def _as_lane_slab(inputs, targets):
    """Flatten to a (rows, 128) lane-dense view in native dtype; pad only if required."""
    n = inputs.size
    pad = (-n) % _TILE
    xf = inputs.reshape(-1)
    tf = targets.reshape(-1)
    if pad:
        # Padded logit -1e9 / target 0 -> bce == 0 exactly, so padded elements
        # contribute nothing to any partial sum.
        xf = jnp.pad(xf, (0, pad), constant_values=-1e9)
        tf = jnp.pad(tf, (0, pad), constant_values=0)
    rows = (n + pad) // _LANES
    return xf.reshape(rows, _LANES), tf.reshape(rows, _LANES), n, rows, pad


def _partial_sums(x2d, t2d):
    rows = x2d.shape[0]
    block_rows = min(_MAX_BLOCK_ROWS, rows)
    steps = pl.cdiv(rows, block_rows)
    partials = pl.pallas_call(
        _make_sums_kernel(rows),
        out_shape=jax.ShapeDtypeStruct((steps, 3 * _SUBLANES, _LANES), jnp.float32),
        grid=(steps,),
        in_specs=[pl.BlockSpec((block_rows, _LANES), lambda i: (i, 0)),
                  pl.BlockSpec((block_rows, _LANES), lambda i: (i, 0))],
        out_specs=pl.BlockSpec((1, 3 * _SUBLANES, _LANES), lambda i: (i, 0, 0)),
        compiler_params=pltpu.CompilerParams(
            dimension_semantics=("parallel",),   # shards across TensorCores on v7x
            vmem_limit_bytes=_VMEM_LIMIT_BYTES),
    )(x2d, t2d)
    # Tiny (steps, 24, 128) slab -> 3 scalars; cheap XLA glue reduce.
    sums = jnp.sum(partials.reshape(steps, 3, _SUBLANES * _LANES), axis=(0, 2))
    return sums[0], sums[1], sums[2]


def weighted_bce_loss_with_logits(inputs, targets, reduction="mean"):
    assert reduction in ("mean", "sum", "none")
    orig_shape = inputs.shape
    x2d, t2d, n, rows, pad = _as_lane_slab(inputs, targets)

    s_t, s_a, s_b = _partial_sums(x2d, t2d)
    m = s_t / n                       # negative_weights = mean(targets)

    if reduction in ("mean", "sum"):
        total = s_a + m * s_b         # == sum_i weights_i * bce_i
        return total / n if reduction == "mean" else total

    # reduction == 'none': elementwise weighted loss, m passed as SMEM scalar.
    out_dtype = inputs.dtype if jnp.issubdtype(inputs.dtype, jnp.floating) else jnp.float32
    block_rows = min(_MAX_BLOCK_ROWS, rows)
    steps = pl.cdiv(rows, block_rows)
    out = pl.pallas_call(
        _elementwise_kernel,
        out_shape=jax.ShapeDtypeStruct((rows, _LANES), out_dtype),
        grid=(steps,),
        in_specs=[pl.BlockSpec(memory_space=pltpu.MemorySpace.SMEM),
                  pl.BlockSpec((block_rows, _LANES), lambda i: (i, 0)),
                  pl.BlockSpec((block_rows, _LANES), lambda i: (i, 0))],
        out_specs=pl.BlockSpec((block_rows, _LANES), lambda i: (i, 0)),
        compiler_params=pltpu.CompilerParams(
            dimension_semantics=("parallel",),
            vmem_limit_bytes=_VMEM_LIMIT_BYTES),
    )(jnp.reshape(m, (1,)).astype(jnp.float32), x2d, t2d)

    if pad:
        return out.reshape(-1)[:n].reshape(orig_shape)
    return out.reshape(orig_shape)


class WeightedBCEWithLogitsLoss:
    """Mirror of the PyTorch module's forward (no parameters)."""

    def __init__(self, reduction: str = "mean"):
        assert reduction in ("mean", "sum", "none")
        self.reduction = reduction

    def __call__(self, inputs, targets):
        return weighted_bce_loss_with_logits(inputs, targets, self.reduction)


def _reference(inputs, targets, reduction="mean"):
    x = inputs.astype(jnp.float32)
    t = targets.astype(jnp.float32)
    m = jnp.mean(t)
    w = t * (1.0 - m) + (1.0 - t) * m
    bce = jnp.maximum(x, 0.0) - x * t + jnp.log1p(jnp.exp(-jnp.abs(x)))
    loss = w * bce
    if reduction == "mean":
        return jnp.mean(loss)
    if reduction == "sum":
        return jnp.sum(loss)
    return loss


if __name__ == "__main__":
    key = jax.random.PRNGKey(0)
    k1, k2 = jax.random.split(key)
    shape = (2, 4, 16, 16)  # NCHW, as the conv-style callers of this loss use
    inputs = jax.random.normal(k1, shape, dtype=jnp.float32)
    targets = jax.random.bernoulli(k2, p=0.3, shape=shape).astype(jnp.float32)

    ok = True
    for reduction in ("mean", "sum", "none"):
        mod = WeightedBCEWithLogitsLoss(reduction=reduction)
        out = jax.block_until_ready(mod(inputs, targets))
        ref = jax.block_until_ready(_reference(inputs, targets, reduction))
        if not jnp.allclose(out, ref, rtol=1e-5, atol=1e-5):
            ok = False
            print(f"MISMATCH for reduction={reduction}")

    if ok:
        print("KERNEL_OK")
</pallas_src>

<mosaic_0001>
module attributes {stable_mosaic.version = 11 : i64} {
  func.func @kernel(%arg0: i32, %arg1: memref<16x128xf32, #tpu.memory_space<vmem>>, %arg2: memref<16x128xf32, #tpu.memory_space<vmem>>, %arg3: memref<1x24x128xf32, #tpu.memory_space<vmem>>) attributes {dimension_semantics = [#tpu.dimension_semantics<parallel>], iteration_bounds = array<i64: 1>, scalar_prefetch = 0 : i64, scratch_operands = 0 : i64, tpu.core_type = #tpu.core_type<tc>, window_params = [{transform_indices = @transform_0, window_bounds = array<i64: 16, 128>}, {transform_indices = @transform_1, window_bounds = array<i64: 16, 128>}, {transform_indices = @transform_2, window_bounds = array<i64: 1, 24, 128>}]} {
    %c0 = arith.constant 0 : index
    %c0_0 = arith.constant 0 : index
    %0 = vector.load %arg1[%c0, %c0_0] : memref<16x128xf32, #tpu.memory_space<vmem>>, vector<16x128xf32>
    %c0_1 = arith.constant 0 : index
    %c0_2 = arith.constant 0 : index
    %1 = vector.load %arg2[%c0_1, %c0_2] : memref<16x128xf32, #tpu.memory_space<vmem>>, vector<16x128xf32>
    %cst = arith.constant 0.000000e+00 : f32
    %2 = vector.broadcast %cst : f32 to vector<16x128xf32>
    %3 = arith.maximumf %0, %2 : vector<16x128xf32>
    %4 = arith.mulf %0, %1 : vector<16x128xf32>
    %5 = arith.subf %3, %4 : vector<16x128xf32>
    %6 = math.absf %0 : vector<16x128xf32>
    %cst_3 = arith.constant 0.000000e+00 : f32
    %7 = vector.broadcast %cst_3 : f32 to vector<16x128xf32>
    %8 = arith.subf %7, %6 : vector<16x128xf32>
    %9 = math.exp %8 : vector<16x128xf32>
    %10 = math.log1p %9 : vector<16x128xf32>
    %11 = arith.addf %5, %10 : vector<16x128xf32>
    %12 = vector.shape_cast %1 : vector<16x128xf32> to vector<2x8x128xf32>
    %cst_4 = arith.constant dense<0.000000e+00> : vector<8x128xf32>
    %13 = vector.multi_reduction <add>, %12, %cst_4 [0] : vector<2x8x128xf32> to vector<8x128xf32>
    %c0_5 = arith.constant 0 : index
    %c0_6 = arith.constant 0 : index
    %c0_7 = arith.constant 0 : index
    %14 = vector.load %arg3[%c0_5, %c0_6, %c0_7] : memref<1x24x128xf32, #tpu.memory_space<vmem>>, vector<1x8x128xf32>
    %15 = vector.shape_cast %14 : vector<1x8x128xf32> to vector<8x128xf32>
    %16 = vector.shape_cast %13 : vector<8x128xf32> to vector<1x8x128xf32>
    tpu.vector_store %arg3[%c0_5, %c0_6, %c0_7], %16 {strides = array<i32>} : memref<1x24x128xf32, #tpu.memory_space<vmem>>, vector<1x8x128xf32>,
    %17 = arith.mulf %1, %11 : vector<16x128xf32>
    %18 = vector.shape_cast %17 : vector<16x128xf32> to vector<2x8x128xf32>
    %cst_8 = arith.constant dense<0.000000e+00> : vector<8x128xf32>
    %19 = vector.multi_reduction <add>, %18, %cst_8 [0] : vector<2x8x128xf32> to vector<8x128xf32>
    %c0_9 = arith.constant 0 : index
    %c8 = arith.constant 8 : index
    %c0_10 = arith.constant 0 : index
    %20 = vector.load %arg3[%c0_9, %c8, %c0_10] : memref<1x24x128xf32, #tpu.memory_space<vmem>>, vector<1x8x128xf32>
    %21 = vector.shape_cast %20 : vector<1x8x128xf32> to vector<8x128xf32>
    %22 = vector.shape_cast %19 : vector<8x128xf32> to vector<1x8x128xf32>
    tpu.vector_store %arg3[%c0_9, %c8, %c0_10], %22 {strides = array<i32>} : memref<1x24x128xf32, #tpu.memory_space<vmem>>, vector<1x8x128xf32>,
    %cst_11 = arith.constant 2.000000e+00 : f32
    %23 = vector.broadcast %cst_11 : f32 to vector<16x128xf32>
    %24 = arith.mulf %23, %1 : vector<16x128xf32>
    %cst_12 = arith.constant 1.000000e+00 : f32
    %25 = vector.broadcast %cst_12 : f32 to vector<16x128xf32>
    %26 = arith.subf %25, %24 : vector<16x128xf32>
    %27 = arith.mulf %26, %11 : vector<16x128xf32>
    %28 = vector.shape_cast %27 : vector<16x128xf32> to vector<2x8x128xf32>
    %cst_13 = arith.constant dense<0.000000e+00> : vector<8x128xf32>
    %29 = vector.multi_reduction <add>, %28, %cst_13 [0] : vector<2x8x128xf32> to vector<8x128xf32>
    %c0_14 = arith.constant 0 : index
    %c16 = arith.constant 16 : index
    %c0_15 = arith.constant 0 : index
    %30 = vector.load %arg3[%c0_14, %c16, %c0_15] : memref<1x24x128xf32, #tpu.memory_space<vmem>>, vector<1x8x128xf32>
    %31 = vector.shape_cast %30 : vector<1x8x128xf32> to vector<8x128xf32>
    %32 = vector.shape_cast %29 : vector<8x128xf32> to vector<1x8x128xf32>
    tpu.vector_store %arg3[%c0_14, %c16, %c0_15], %32 {strides = array<i32>} : memref<1x24x128xf32, #tpu.memory_space<vmem>>, vector<1x8x128xf32>,
    return
  }
  func.func @transform_0(%arg0: i32) -> (i32, i32) {
    %c0_i32 = arith.constant 0 : i32
    %c0_i32_0 = arith.constant 0 : i32
    return %arg0, %c0_i32 : i32, i32
  }
  func.func @transform_1(%arg0: i32) -> (i32, i32) {
    %c0_i32 = arith.constant 0 : i32
    %c0_i32_0 = arith.constant 0 : i32
    return %arg0, %c0_i32 : i32, i32
  }
  func.func @transform_2(%arg0: i32) -> (i32, i32, i32) {
    %c0_i32 = arith.constant 0 : i32
    %c0_i32_0 = arith.constant 0 : i32
    %c0_i32_1 = arith.constant 0 : i32
    return %arg0, %c0_i32, %c0_i32_0 : i32, i32, i32
  }
}

</mosaic_0001>

<llo_original>
// kernel: tpu_custom_call.1
$region0: #{tpu_custom_call.1}
  #allocation0 [shape = 'u32[]', space=smem, size = 0x4, offset = 0x4, fixed_abs, tag = 'smem constant byte address 0x4 - core index']
  #allocation1 [shape = 'u32[144,128]{1,0:T(1,128)}', space=vmem, size = 0x12000, scoped, tag = 'internal scratch']
  %s0 = inlined_call_operand.hbm [shape: f32[16,128], index: 0, kind: input, shape index: {}]
  %s1 = inlined_call_operand.hbm [shape: f32[16,128], index: 1, kind: input, shape index: {}]
  %s2 = inlined_call_operand.hbm [shape: f32[1,24,128], index: 2, kind: output, shape index: {}]
  %s3 = sld [smem:[#allocation0]]
  $region26: #{tpu_custom_call.1} parent=0
    _
  %s5 = ssub.s32 1, %s3
  %s6 = scalar_select 0, %s5, %s3
  $region1: #{tpu_custom_call.1} parent=0
    #allocation2 [shape = 'u8[8192]{0}', space=vmem, size = 0x2000, scoped, tag = 'input window, operand 0, single buffered']
    #allocation3 [shape = 's32[1]{0}', space=sflag, size = 0x4, scoped, tag = 'scoped memory for tpu_custom_call.1']
    #allocation4 [shape = 's32[1]{0}', space=sflag, size = 0x4, scoped, tag = 'scoped memory for tpu_custom_call.1']
    #allocation5 [shape = 'u8[8192]{0}', space=vmem, size = 0x2000, scoped, tag = 'input window, operand 1, single buffered']
    #allocation6 [shape = 's32[1]{0}', space=sflag, size = 0x4, scoped, tag = 'scoped memory for tpu_custom_call.1']
    #allocation7 [shape = 'u8[12288]{0}', space=vmem, size = 0x3000, scoped, tag = 'output window, operand 0, single buffered']
    %7 = vsyncpa [#allocation3], 0
    %8 = vsyncpa [#allocation6], 0
    %9 = vsyncpa [#allocation4], 0
    // Predicated region
    $region2: #{tpu_custom_call.1} parent=1 // pred_check
      _
    $region3: #{tpu_custom_call.1} parent=1 // pred_check_branch
      %11 = sbr.rel (0) target = $region5
    $region4: #{tpu_custom_call.1} parent=1 // pred_region
      %s13 = ssub.s32 256, 256
      %14 = vsyncadd [#allocation3], %s13
      %s15 = sshll.u32 [#allocation2], 4
      %s16 = int_to_ptr.vmem [resolvable:$true] %s15
      %21 = dma.hbm_to_vmem [thread:$0]  %s0, 256, %s16, [#allocation3], 128, 128, 8
    $region5: #{tpu_custom_call.1} parent=1 // pred_fallthru
      _
    // Predicated region
    $region6: #{tpu_custom_call.1} parent=1 // pred_check
      _
    $region7: #{tpu_custom_call.1} parent=1 // pred_check_branch
      %23 = sbr.rel (0) target = $region9
    $region8: #{tpu_custom_call.1} parent=1 // pred_region
      %s25 = ssub.s32 256, 256
      %26 = vsyncadd [#allocation6], %s25
      %s27 = sshll.u32 [#allocation5], 4
      %s28 = int_to_ptr.vmem [resolvable:$true] %s27
      %33 = dma.hbm_to_vmem [thread:$0]  %s1, 256, %s28, [#allocation6], 128, 128, 8
    $region9: #{tpu_custom_call.1} parent=1 // pred_fallthru
      _
    // Predicated region
    $region10: #{tpu_custom_call.1} parent=1 // pred_check
      _
    $region11: #{tpu_custom_call.1} parent=1 // pred_check_branch
      %35 = sbr.rel (0) target = $region13
    $region12: #{tpu_custom_call.1} parent=1 // pred_region
      %36 = dma.done [#allocation3], 256
    $region13: #{tpu_custom_call.1} parent=1 // pred_fallthru
      _
    // Predicated region
    $region14: #{tpu_custom_call.1} parent=1 // pred_check
      _
    $region15: #{tpu_custom_call.1} parent=1 // pred_check_branch
      %38 = sbr.rel (0) target = $region17
    $region16: #{tpu_custom_call.1} parent=1 // pred_region
      %39 = dma.done [#allocation6], 256
    $region17: #{tpu_custom_call.1} parent=1 // pred_fallthru
      _
    %v40 = vld [vmem:[#allocation2] sm:$0xff]
    %v41 = vld [vmem:[#allocation2 + $0x8] sm:$0xff]
    %v42 = vld [vmem:[#allocation5] sm:$0xff]
    %v43 = vld [vmem:[#allocation5 + $0x8] sm:$0xff]
    %v44 = vmax.f32 %v40, 0.0
    %v45 = vmax.f32 %v41, 0.0
    %v46 = vmul.f32 %v40, %v42
    %v47 = vmul.f32 %v41, %v43
    %v48 = vsub.f32 %v44, %v46
    %v49 = vsub.f32 %v45, %v47
    %v50 = vand.u32 2147483647, %v40
    %v51 = vand.u32 2147483647, %v41
    %v52 = vsub.f32 0.0, %v50
    %v53 = vsub.f32 0.0, %v51
    %v54 = vmul.f32 %v52, 1.442695
    %v55 = vpow.pop %v54
    %v56 = vmul.f32 %v53, 1.442695
    %v57 = vpow.pop %v56
    %v58 = vadd.f32 %v55, 1.0
    %v59 = vlog2.pop %v58
    %v60 = vmul.f32 %v59, 0.6931472
    %v61 = vmul.f32 -0.5, %v55
    %v62 = vadd.f32 %v61, 1.0
    %v63 = vmul.f32 %v62, %v55
    %v64 = vand.u32 2147483647, %v55
    %vm65 = vcmp.lt.f32.partialorder %v64, 0.0004427343
    %v66 = vsel %vm65, %v63, %v60
    %v67 = vadd.f32 %v57, 1.0
    %v68 = vlog2.pop %v67
    %v69 = vmul.f32 %v68, 0.6931472
    %v70 = vmul.f32 -0.5, %v57
    %v71 = vadd.f32 %v70, 1.0
    %v72 = vmul.f32 %v71, %v57
    %v73 = vand.u32 2147483647, %v57
    %vm74 = vcmp.lt.f32.partialorder %v73, 0.0004427343
    %v75 = vsel %vm74, %v72, %v69
    %v76 = vadd.f32 %v48, %v66
    %v77 = vadd.f32 %v49, %v75
    %v78 = vadd.f32 %v42, %v43
    %79 = vst [vmem:[#allocation7] sm:$0xff] %v78
    %v80 = vmul.f32 %v42, %v76
    %v81 = vmul.f32 %v43, %v77
    %v82 = vadd.f32 %v80, %v81
    %83 = vst [vmem:[#allocation7 + $0x8] sm:$0xff] %v82
    %v84 = vmul.f32 %v42, 2.0
    %v85 = vmul.f32 %v43, 2.0
    %v86 = vsub.f32 1.0, %v84
    %v87 = vsub.f32 1.0, %v85
    %v88 = vmul.f32 %v86, %v76
    %v89 = vmul.f32 %v87, %v77
    %v90 = vadd.f32 %v88, %v89
    %91 = vst [vmem:[#allocation7 + $0x10] sm:$0xff] %v90
    // Predicated region
    $region18: #{tpu_custom_call.1} parent=1 // pred_check
      _
    $region19: #{tpu_custom_call.1} parent=1 // pred_check_branch
      %93 = sbr.rel (0) target = $region21
    $region20: #{tpu_custom_call.1} parent=1 // pred_region
      %s95 = ssub.s32 384, 384
      %96 = vsyncadd [#allocation4], %s95
      %s97 = sshll.u32 [#allocation7], 4
      %s98 = int_to_ptr.vmem [resolvable:$true] %s97
      %103 = dma.vmem_to_hbm [thread:$0]  %s98, 384, %s2, [#allocation4], 128, 128, 8
    $region21: #{tpu_custom_call.1} parent=1 // pred_fallthru
      _
    // Predicated region
    $region22: #{tpu_custom_call.1} parent=1 // pred_check
      _
    $region23: #{tpu_custom_call.1} parent=1 // pred_check_branch
      %105 = sbr.rel (0) target = $region25
    $region24: #{tpu_custom_call.1} parent=1 // pred_region
      %106 = dma.done [#allocation4], 384
    $region25: #{tpu_custom_call.1} parent=1 // pred_fallthru
      _
    %107 = vsyncpa [#allocation3], 1
    %108 = vsyncpa [#allocation6], 1
    %109 = vsyncpa [#allocation4], 1

</llo_original>
